<compile_context>
chip_gen: v6e
topology: v6e:2x2x1
jax: 0.10.0
libtpu: 0.0.40
codegen_flags: <defaults>
</compile_context>

<pallas_src>
import math

import jax
import jax.numpy as jnp
from jax import lax
from jax.experimental import pallas as pl
from jax.experimental.pallas import tpu as pltpu


def _round_up(n, m):
    return ((n + m - 1) // m) * m


def _cdiv(a, b):
    return (a + b - 1) // b


def _discriminator_kernel(x_ref, w1_ref, b1_ref, w2_ref, b2_ref, o_ref):
    x = x_ref[...]        # (TB, D)  batch tile, natural layout (efficient DMA)
    w1 = w1_ref[...]      # (H, D)   PyTorch Linear layout (out, in)

    # h^T = W1 @ x^T : contract the D axis of both operands (NT matmul, MXU).
    # Same dimension numbers as splash attention's q @ k^T -- the streamed x
    # operand is consumed as a transposed RHS, no in-kernel XLU transpose.
    ht = lax.dot_general(
        w1, x,
        dimension_numbers=(((1,), (1,)), ((), ())),
        preferred_element_type=jnp.float32,
    )
    # Bias + ReLU (b1 is an (H, 1) column, lane-broadcast).
    ht = jnp.maximum(ht + b1_ref[...], 0.0)

    # Second Linear(128 -> 1): VPU multiply + sublane (XLU) reduction;
    # produces a lane-dense (1, TB) row directly.
    z = jnp.sum(ht * w2_ref[...], axis=0, keepdims=True) + b2_ref[0, 0]

    # Sigmoid: exp + approximate reciprocal, both on the (otherwise idle) EUP.
    o_ref[...] = pl.reciprocal(1.0 + jnp.exp(-z), approx=True).astype(o_ref.dtype)


def discriminator_forward(x, w1, b1, w2, b2, *, max_block_b=8192):
    """x: (B, data_dim).  w1: (128, D), b1: (128, 1), w2: (128, 1), b2: (1, 1).
    Returns sigmoid(relu(x @ w1.T + b1.T) @ w2 + b2) of shape (B, 1), f32."""
    B, D = x.shape
    H = w1.shape[0]

    # Batch tile: as large as possible (amortize the ~0.35us per-step cost),
    # multiple of 8 sublanes; split a single huge tile in two so both v7x
    # TensorCores get work.
    TB = min(max_block_b, _round_up(B, 8))
    if B >= 4096 and _cdiv(B, TB) < 2:
        TB = _round_up(_cdiv(B, 2), 128)   # >=2 grid steps; keep lane-aligned
    num_tiles = _cdiv(B, TB)
    out_w = num_tiles * TB                 # tiny kernel-side padding, no x pad
    grid = (num_tiles,)

    # Allow bf16 activations: cast the resident w1 to match; accumulation
    # stays f32 via preferred_element_type.
    w1 = w1.astype(x.dtype)

    # VMEM budget: 2 x lane-padded x tile (TB*1 KiB) + (H, TB) f32
    # intermediates (~TB*1.5 KiB) + output/weights.  Raise the scoped limit
    # past v5e/v6e defaults; the default TB keeps it well under v7x's 64 MiB.
    vmem_limit = int(min(100 * 1024 * 1024,
                         max(32 * 1024 * 1024, 16 * 1024 * 1024 + 3 * 1024 * TB)))

    itemsize = jnp.dtype(x.dtype).itemsize
    cost = pl.CostEstimate(
        flops=2 * B * D * H + 2 * B * H,
        transcendentals=2 * B,                       # exp + reciprocal per row
        bytes_accessed=B * D * itemsize + 4 * (H * D + 2 * H + 1 + out_w),
    )

    out = pl.pallas_call(
        _discriminator_kernel,
        out_shape=jax.ShapeDtypeStruct((1, out_w), jnp.float32),
        grid=grid,
        in_specs=[
            pl.BlockSpec((TB, D), lambda i: (i, 0)),      # x: tiled over batch
            pl.BlockSpec((H, D), lambda i: (0, 0)),       # w1: VMEM-resident
            pl.BlockSpec((H, 1), lambda i: (0, 0)),       # b1: VMEM-resident
            pl.BlockSpec((H, 1), lambda i: (0, 0)),       # w2 (column): resident
            pl.BlockSpec(memory_space=pltpu.MemorySpace.SMEM),  # b2 scalar
        ],
        out_specs=pl.BlockSpec((1, TB), lambda i: (0, i)),  # lane-dense output row
        compiler_params=pltpu.CompilerParams(
            dimension_semantics=("parallel",),
            vmem_limit_bytes=vmem_limit,
        ),
        cost_estimate=cost,
    )(x, w1, b1, w2, b2)

    # Tiny (1, out_w) -> (B, 1) layout fix-up outside the kernel.
    return out[0, :B].reshape(B, 1)


def init_params(key, data_dim, hidden=128):
    """PyTorch nn.Linear default init: U(-1/sqrt(fan_in), 1/sqrt(fan_in)).
    Layouts: w1 (H, D) (PyTorch (out, in)), b1 (H, 1), w2 (H, 1) (= PyTorch
    (1, H) transposed), b2 (1, 1)."""
    k1, k2, k3, k4 = jax.random.split(key, 4)
    bound1 = 1.0 / math.sqrt(data_dim)
    bound2 = 1.0 / math.sqrt(hidden)
    w1 = jax.random.uniform(k1, (hidden, data_dim), jnp.float32, -bound1, bound1)
    b1 = jax.random.uniform(k2, (hidden, 1), jnp.float32, -bound1, bound1)
    w2 = jax.random.uniform(k3, (hidden, 1), jnp.float32, -bound2, bound2)
    b2 = jax.random.uniform(k4, (1, 1), jnp.float32, -bound2, bound2)
    return w1, b1, w2, b2


def _reference_forward(x, w1, b1, w2, b2):
    h = jnp.maximum(x @ w1.T + b1[:, 0], 0.0)
    z = h @ w2 + b2[0, 0]
    return jax.nn.sigmoid(z)


if __name__ == "__main__":
    key = jax.random.PRNGKey(0)
    k_x, k_p = jax.random.split(key)

    batch = 8
    data_dim = 32

    x = jax.random.normal(k_x, (batch, data_dim), jnp.float32)
    w1, b1, w2, b2 = init_params(k_p, data_dim)

    out = discriminator_forward(x, w1, b1, w2, b2)
    out = jax.block_until_ready(out)

    ref = _reference_forward(x, w1, b1, w2, b2)
    assert out.shape == (batch, 1), out.shape
    # approx reciprocal (EUP) sigmoid => compare at a slightly relaxed tolerance
    # TODO(synk): if this score ever feeds a loss/grad path, drop approx=True.
    assert jnp.allclose(out, ref, atol=2e-3, rtol=1e-3), (out, ref)

    print("KERNEL_OK")
</pallas_src>

<mosaic_0001>
module attributes {stable_mosaic.version = 11 : i64} {
  func.func @_discriminator_kernel(%arg0: i32, %arg1: memref<8x32xf32, #tpu.memory_space<vmem>>, %arg2: memref<128x32xf32, #tpu.memory_space<vmem>>, %arg3: memref<128x1xf32, #tpu.memory_space<vmem>>, %arg4: memref<128x1xf32, #tpu.memory_space<vmem>>, %arg5: memref<1x1xf32, #tpu.memory_space<smem>>, %arg6: memref<1x8xf32, #tpu.memory_space<vmem>>) attributes {dimension_semantics = [#tpu.dimension_semantics<parallel>], iteration_bounds = array<i64: 1>, scalar_prefetch = 0 : i64, scratch_operands = 0 : i64, tpu.core_type = #tpu.core_type<tc>, window_params = [{transform_indices = @transform_0, window_bounds = array<i64: 8, 32>}, {pipeline_mode = #tpu.pipeline_mode<synchronous>, transform_indices = @transform_1, window_bounds = array<i64: 128, 32>}, {pipeline_mode = #tpu.pipeline_mode<synchronous>, transform_indices = @transform_2, window_bounds = array<i64: 128, 1>}, {pipeline_mode = #tpu.pipeline_mode<synchronous>, transform_indices = @transform_3, window_bounds = array<i64: 128, 1>}, {transform_indices = @transform_4, window_bounds = array<i64: 1, 1>}, {transform_indices = @transform_5, window_bounds = array<i64: 1, 8>}]} {
    %c0 = arith.constant 0 : index
    %c0_0 = arith.constant 0 : index
    %0 = vector.load %arg1[%c0, %c0_0] : memref<8x32xf32, #tpu.memory_space<vmem>>, vector<8x32xf32>
    %c0_1 = arith.constant 0 : index
    %c0_2 = arith.constant 0 : index
    %1 = vector.load %arg2[%c0_1, %c0_2] : memref<128x32xf32, #tpu.memory_space<vmem>>, vector<128x32xf32>
    %cst = arith.constant dense<0.000000e+00> : vector<128x8xf32>
    %2 = tpu.matmul %1, %0, %cst {dimension_numbers = #tpu.dot_dimension_numbers<[1], [1], [0], [0], [0, 0, 1, 0], [], []>} : vector<128x32xf32>, vector<8x32xf32>, vector<128x8xf32> -> vector<128x8xf32>
    %c0_3 = arith.constant 0 : index
    %c0_4 = arith.constant 0 : index
    %3 = vector.load %arg3[%c0_3, %c0_4] : memref<128x1xf32, #tpu.memory_space<vmem>>, vector<128x1xf32>
    %4 = vector.broadcast %3 : vector<128x1xf32> to vector<128x8xf32>
    %5 = arith.addf %2, %4 : vector<128x8xf32>
    %cst_5 = arith.constant 0.000000e+00 : f32
    %6 = vector.broadcast %cst_5 : f32 to vector<128x8xf32>
    %7 = arith.maximumf %5, %6 : vector<128x8xf32>
    %c0_6 = arith.constant 0 : index
    %c0_7 = arith.constant 0 : index
    %8 = vector.load %arg4[%c0_6, %c0_7] : memref<128x1xf32, #tpu.memory_space<vmem>>, vector<128x1xf32>
    %9 = vector.broadcast %8 : vector<128x1xf32> to vector<128x8xf32>
    %10 = arith.mulf %7, %9 : vector<128x8xf32>
    %cst_8 = arith.constant dense<0.000000e+00> : vector<8xf32>
    %11 = vector.multi_reduction <add>, %10, %cst_8 [0] : vector<128x8xf32> to vector<8xf32>
    %12 = vector.shape_cast %11 : vector<8xf32> to vector<1x8xf32>
    %c0_9 = arith.constant 0 : index
    %c0_10 = arith.constant 0 : index
    %13 = memref.load %arg5[%c0_9, %c0_10] : memref<1x1xf32, #tpu.memory_space<smem>>
    %14 = vector.broadcast %13 : f32 to vector<1x8xf32>
    %15 = arith.addf %12, %14 : vector<1x8xf32>
    %cst_11 = arith.constant 0.000000e+00 : f32
    %16 = vector.broadcast %cst_11 : f32 to vector<1x8xf32>
    %17 = arith.subf %16, %15 : vector<1x8xf32>
    %18 = math.exp %17 : vector<1x8xf32>
    %cst_12 = arith.constant 1.000000e+00 : f32
    %19 = vector.broadcast %cst_12 : f32 to vector<1x8xf32>
    %20 = arith.addf %19, %18 : vector<1x8xf32>
    %21 = tpu.reciprocal %20 {approx = true} : vector<1x8xf32> -> vector<1x8xf32>
    %c0_13 = arith.constant 0 : index
    %c0_14 = arith.constant 0 : index
    %22 = vector.load %arg6[%c0_13, %c0_14] : memref<1x8xf32, #tpu.memory_space<vmem>>, vector<1x8xf32>
    tpu.vector_store %arg6[%c0_13, %c0_14], %21 {strides = array<i32>} : memref<1x8xf32, #tpu.memory_space<vmem>>, vector<1x8xf32>,
    return
  }
  func.func @transform_0(%arg0: i32) -> (i32, i32) {
    %c0_i32 = arith.constant 0 : i32
    %c0_i32_0 = arith.constant 0 : i32
    return %arg0, %c0_i32 : i32, i32
  }
  func.func @transform_1(%arg0: i32) -> (i32, i32) {
    %c0_i32 = arith.constant 0 : i32
    %c0_i32_0 = arith.constant 0 : i32
    %c0_i32_1 = arith.constant 0 : i32
    return %c0_i32, %c0_i32_0 : i32, i32
  }
  func.func @transform_2(%arg0: i32) -> (i32, i32) {
    %c0_i32 = arith.constant 0 : i32
    %c0_i32_0 = arith.constant 0 : i32
    %c0_i32_1 = arith.constant 0 : i32
    return %c0_i32, %c0_i32_0 : i32, i32
  }
  func.func @transform_3(%arg0: i32) -> (i32, i32) {
    %c0_i32 = arith.constant 0 : i32
    %c0_i32_0 = arith.constant 0 : i32
    %c0_i32_1 = arith.constant 0 : i32
    return %c0_i32, %c0_i32_0 : i32, i32
  }
  func.func @transform_4(%arg0: i32) -> (i32, i32) {
    %c0_i32 = arith.constant 0 : i32
    %c0_i32_0 = arith.constant 0 : i32
    %c0_i32_1 = arith.constant 0 : i32
    return %c0_i32, %c0_i32_0 : i32, i32
  }
  func.func @transform_5(%arg0: i32) -> (i32, i32) {
    %c0_i32 = arith.constant 0 : i32
    %c0_i32_0 = arith.constant 0 : i32
    return %c0_i32, %arg0 : i32, i32
  }
}

</mosaic_0001>

<llo_original>
// kernel: tpu_custom_call.1
$region0: #{tpu_custom_call.1}
  #allocation0 [shape = 'u32[]', space=smem, size = 0x4, offset = 0x4, fixed_abs, tag = 'smem constant byte address 0x4 - core index']
  #allocation1 [shape = 'u32[144,128]{1,0:T(1,128)}', space=vmem, size = 0x12000, scoped, tag = 'internal scratch']
  #allocation2 [shape = 'f32[1,1]{1,0:T(1,128)S(6)}', space=smem, size = 0x200, scoped, tag = 'scoped memory for tpu_custom_call.1']
  %s0 = inlined_call_operand.vmem [shape: f32[8,32], index: 0, kind: input, shape index: {}]
  %s1 = inlined_call_operand.vmem [shape: f32[128,32], index: 1, kind: input, shape index: {}]
  %s2 = inlined_call_operand.vmem [shape: f32[128,1], index: 2, kind: input, shape index: {}]
  %s3 = inlined_call_operand.vmem [shape: f32[128,1], index: 3, kind: input, shape index: {}]
  %s4 = inlined_call_operand.<no memory space> [shape: f32[1,1], index: 4, kind: input, shape index: {}]
  %s5 = inlined_call_operand.hbm [shape: f32[1,8], index: 5, kind: output, shape index: {}]
  %s6 = sld [smem:[#allocation0]]
  $region30: #{tpu_custom_call.1} parent=0
    _
  %s8 = ssub.s32 1, %s6
  %s9 = scalar_select 0, %s8, %s6
  %10 = sst [smem:[#allocation2]] %s4
  $region1: #{tpu_custom_call.1} parent=0
    #allocation3 [shape = 'u8[512]{0}', space=vmem, size = 0x400, scoped, tag = 'output window, operand 0, single buffered']
    #allocation4 [shape = 's32[1]{0}', space=sflag, size = 0x4, scoped, tag = 'scoped memory for tpu_custom_call.1']
    %11 = vsyncpa [#allocation4], 0
    // Predicated region
    $region2: #{tpu_custom_call.1} parent=1 // pred_check
      _
    $region3: #{tpu_custom_call.1} parent=1 // pred_check_branch
      %13 = sbr.rel (0) target = $region5
    $region4: #{tpu_custom_call.1} parent=1 // pred_region
      _
    $region5: #{tpu_custom_call.1} parent=1 // pred_fallthru
      _
    // Predicated region
    $region6: #{tpu_custom_call.1} parent=1 // pred_check
      _
    $region7: #{tpu_custom_call.1} parent=1 // pred_check_branch
      %15 = sbr.rel (0) target = $region9
    $region8: #{tpu_custom_call.1} parent=1 // pred_region
      _
    $region9: #{tpu_custom_call.1} parent=1 // pred_fallthru
      _
    // Predicated region
    $region10: #{tpu_custom_call.1} parent=1 // pred_check
      _
    $region11: #{tpu_custom_call.1} parent=1 // pred_check_branch
      %17 = sbr.rel (0) target = $region13
    $region12: #{tpu_custom_call.1} parent=1 // pred_region
      _
    $region13: #{tpu_custom_call.1} parent=1 // pred_fallthru
      _
    // Predicated region
    $region14: #{tpu_custom_call.1} parent=1 // pred_check
      _
    $region15: #{tpu_custom_call.1} parent=1 // pred_check_branch
      %19 = sbr.rel (0) target = $region17
    $region16: #{tpu_custom_call.1} parent=1 // pred_region
      _
    $region17: #{tpu_custom_call.1} parent=1 // pred_fallthru
      _
    // Predicated region
    $region18: #{tpu_custom_call.1} parent=1 // pred_check
      _
    $region19: #{tpu_custom_call.1} parent=1 // pred_check_branch
      %21 = sbr.rel (0) target = $region21
    $region20: #{tpu_custom_call.1} parent=1 // pred_region
      _
    $region21: #{tpu_custom_call.1} parent=1 // pred_fallthru
      _
    %v22 = vld [vmem:[%s0] sm:$0xff]
    %v23 = vld [vmem:[%s1] sm:$0xff]
    %v24 = vld [vmem:[%s1 + $0x8] sm:$0xff]
    %v25 = vld [vmem:[%s1 + $0x10] sm:$0xff]
    %v26 = vld [vmem:[%s1 + $0x18] sm:$0xff]
    %v27 = vld [vmem:[%s1 + $0x20] sm:$0xff]
    %v28 = vld [vmem:[%s1 + $0x28] sm:$0xff]
    %v29 = vld [vmem:[%s1 + $0x30] sm:$0xff]
    %v30 = vld [vmem:[%s1 + $0x38] sm:$0xff]
    %v31 = vld [vmem:[%s1 + $0x40] sm:$0xff]
    %v32 = vld [vmem:[%s1 + $0x48] sm:$0xff]
    %v33 = vld [vmem:[%s1 + $0x50] sm:$0xff]
    %v34 = vld [vmem:[%s1 + $0x58] sm:$0xff]
    %v35 = vld [vmem:[%s1 + $0x60] sm:$0xff]
    %v36 = vld [vmem:[%s1 + $0x68] sm:$0xff]
    %v37 = vld [vmem:[%s1 + $0x70] sm:$0xff]
    %v38 = vld [vmem:[%s1 + $0x78] sm:$0xff]
    %v39 = vld [vmem:[%s2] sm:$0xff]
    %v40 = vld [vmem:[%s2 + $0x8] sm:$0xff]
    %v41 = vld [vmem:[%s2 + $0x10] sm:$0xff]
    %v42 = vld [vmem:[%s2 + $0x18] sm:$0xff]
    %v43 = vld [vmem:[%s2 + $0x20] sm:$0xff]
    %v44 = vld [vmem:[%s2 + $0x28] sm:$0xff]
    %v45 = vld [vmem:[%s2 + $0x30] sm:$0xff]
    %v46 = vld [vmem:[%s2 + $0x38] sm:$0xff]
    %v47 = vld [vmem:[%s2 + $0x40] sm:$0xff]
    %v48 = vld [vmem:[%s2 + $0x48] sm:$0xff]
    %v49 = vld [vmem:[%s2 + $0x50] sm:$0xff]
    %v50 = vld [vmem:[%s2 + $0x58] sm:$0xff]
    %v51 = vld [vmem:[%s2 + $0x60] sm:$0xff]
    %v52 = vld [vmem:[%s2 + $0x68] sm:$0xff]
    %v53 = vld [vmem:[%s2 + $0x70] sm:$0xff]
    %v54 = vld [vmem:[%s2 + $0x78] sm:$0xff]
    %56 = vset.pattern.permute.xlu0 0
    %57 = vperm.xlu0 %56, %v39
    %v58 = vpop.permute.xlu0 %57
    %61 = vset.pattern.permute.xlu0 0
    %62 = vperm.xlu0 %61, %v40
    %v63 = vpop.permute.xlu0 %62
    %66 = vset.pattern.permute.xlu0 0
    %67 = vperm.xlu0 %66, %v41
    %v68 = vpop.permute.xlu0 %67
    %71 = vset.pattern.permute.xlu0 0
    %72 = vperm.xlu0 %71, %v42
    %v73 = vpop.permute.xlu0 %72
    %76 = vset.pattern.permute.xlu0 0
    %77 = vperm.xlu0 %76, %v43
    %v78 = vpop.permute.xlu0 %77
    %81 = vset.pattern.permute.xlu0 0
    %82 = vperm.xlu0 %81, %v44
    %v83 = vpop.permute.xlu0 %82
    %86 = vset.pattern.permute.xlu0 0
    %87 = vperm.xlu0 %86, %v45
    %v88 = vpop.permute.xlu0 %87
    %91 = vset.pattern.permute.xlu0 0
    %92 = vperm.xlu0 %91, %v46
    %v93 = vpop.permute.xlu0 %92
    %96 = vset.pattern.permute.xlu0 0
    %97 = vperm.xlu0 %96, %v47
    %v98 = vpop.permute.xlu0 %97
    %101 = vset.pattern.permute.xlu0 0
    %102 = vperm.xlu0 %101, %v48
    %v103 = vpop.permute.xlu0 %102
    %106 = vset.pattern.permute.xlu0 0
    %107 = vperm.xlu0 %106, %v49
    %v108 = vpop.permute.xlu0 %107
    %111 = vset.pattern.permute.xlu0 0
    %112 = vperm.xlu0 %111, %v50
    %v113 = vpop.permute.xlu0 %112
    %116 = vset.pattern.permute.xlu0 0
    %117 = vperm.xlu0 %116, %v51
    %v118 = vpop.permute.xlu0 %117
    %121 = vset.pattern.permute.xlu0 0
    %122 = vperm.xlu0 %121, %v52
    %v123 = vpop.permute.xlu0 %122
    %126 = vset.pattern.permute.xlu0 0
    %127 = vperm.xlu0 %126, %v53
    %v128 = vpop.permute.xlu0 %127
    %131 = vset.pattern.permute.xlu0 0
    %132 = vperm.xlu0 %131, %v54
    %v133 = vpop.permute.xlu0 %132
    %vm135 = vcmask 261120
    %v137 = vsel %vm135, %v23, 0
    %v140 = vsel %vm135, %v24, 0
    %v143 = vsel %vm135, %v25, 0
    %v146 = vsel %vm135, %v26, 0
    %v149 = vsel %vm135, %v27, 0
    %v152 = vsel %vm135, %v28, 0
    %v155 = vsel %vm135, %v29, 0
    %v158 = vsel %vm135, %v30, 0
    %v161 = vsel %vm135, %v31, 0
    %v164 = vsel %vm135, %v32, 0
    %v167 = vsel %vm135, %v33, 0
    %v170 = vsel %vm135, %v34, 0
    %v173 = vsel %vm135, %v35, 0
    %v176 = vsel %vm135, %v36, 0
    %v179 = vsel %vm135, %v37, 0
    %v182 = vsel %vm135, %v38, 0
    %v185 = vsel %vm135, %v22, 0
    %187 = vmatprep.subr.mxu0 0.0
    %188 = vmatpush1.xpose.msra.mxu0 0.0
    %189 = vmatprep.subr.mxu0 0.0
    %190 = vmatpush1.xpose.msra.mxu0 0.0
    %191 = vmatprep.subr.mxu0 0.0
    %192 = vmatpush1.xpose.msra.mxu0 0.0
    %193 = vmatprep.subr.mxu0 0.0
    %194 = vmatpush1.xpose.msra.mxu0 0.0
    %195 = vmatprep.subr.mxu0 0.0
    %196 = vmatpush1.xpose.msra.mxu0 0.0
    %197 = vmatprep.subr.mxu0 0.0
    %198 = vmatpush1.xpose.msra.mxu0 0.0
    %199 = vmatprep.subr.mxu0 0.0
    %200 = vmatpush1.xpose.msra.mxu0 0.0
    %201 = vmatprep.subr.mxu0 0.0
    %202 = vmatpush1.xpose.msra.mxu0 0.0
    %203 = vmatprep.subr.mxu0 0.0
    %204 = vmatpush1.xpose.msra.mxu0 0.0
    %205 = vmatprep.subr.mxu0 0.0
    %206 = vmatpush1.xpose.msra.mxu0 0.0
    %207 = vmatprep.subr.mxu0 0.0
    %208 = vmatpush1.xpose.msra.mxu0 0.0
    %209 = vmatprep.subr.mxu0 0.0
    %210 = vmatpush1.xpose.msra.mxu0 0.0
    %211 = vmatprep.subr.mxu0 0.0
    %212 = vmatpush1.xpose.msra.mxu0 0.0
    %213 = vmatprep.subr.mxu0 0.0
    %214 = vmatpush1.xpose.msra.mxu0 0.0
    %215 = vmatprep.subr.mxu0 0.0
    %216 = vmatpush1.xpose.msra.mxu0 0.0
    %217 = vmatprep.subr.mxu0 0.0
    %218 = vmatpush1.xpose.msra.mxu0 %v185
    %219 = vmatprep.subr.mxu0 0.0
    %220 = vmatpush2.xpose.msra.mxu0 0.0
    %221 = vmatprep.subr.mxu0 0.0
    %222 = vmatpush2.xpose.msra.mxu0 0.0
    %223 = vmatprep.subr.mxu0 0.0
    %224 = vmatpush2.xpose.msra.mxu0 0.0
    %225 = vmatprep.subr.mxu0 0.0
    %226 = vmatpush2.xpose.msra.mxu0 0.0
    %227 = vmatprep.subr.mxu0 0.0
    %228 = vmatpush2.xpose.msra.mxu0 0.0
    %229 = vmatprep.subr.mxu0 0.0
    %230 = vmatpush2.xpose.msra.mxu0 0.0
    %231 = vmatprep.subr.mxu0 0.0
    %232 = vmatpush2.xpose.msra.mxu0 0.0
    %233 = vmatprep.subr.mxu0 0.0
    %234 = vmatpush2.xpose.msra.mxu0 0.0
    %235 = vmatprep.subr.mxu0 0.0
    %236 = vmatpush2.xpose.msra.mxu0 0.0
    %237 = vmatprep.subr.mxu0 0.0
    %238 = vmatpush2.xpose.msra.mxu0 0.0
    %239 = vmatprep.subr.mxu0 0.0
    %240 = vmatpush2.xpose.msra.mxu0 0.0
    %241 = vmatprep.subr.mxu0 0.0
    %242 = vmatpush2.xpose.msra.mxu0 0.0
    %243 = vmatprep.subr.mxu0 0.0
    %244 = vmatpush2.xpose.msra.mxu0 0.0
    %245 = vmatprep.subr.mxu0 0.0
    %246 = vmatpush2.xpose.msra.mxu0 0.0
    %247 = vmatprep.subr.mxu0 0.0
    %248 = vmatpush2.xpose.msra.mxu0 0.0
    %249 = vmatprep.subr.mxu0 0.0
    %250 = vmatpush2.xpose.msra.mxu0 0.0
    %251 = vmatprep.mubr.f32.mxu0 0.0
    %252 = vmatmul.mubr.f32.gmra.mxu0 %v137
    %v253 = vpop.f32.mrf.mxu0
    %v254 = vadd.f32 %v58, %v253
    %v255 = vpop.f32.mrf.mxu0
    %256 = vmatprep.mubr.f32.mxu0 0.0
    %257 = vmatmul.mubr.f32.gmra.mxu0 %v140
    %v258 = vpop.f32.mrf.mxu0
    %v259 = vadd.f32 %v63, %v258
    %v260 = vpop.f32.mrf.mxu0
    %261 = vmatprep.mubr.f32.mxu0 0.0
    %262 = vmatmul.mubr.f32.gmra.mxu0 %v143
    %v263 = vpop.f32.mrf.mxu0
    %v264 = vadd.f32 %v68, %v263
    %v265 = vpop.f32.mrf.mxu0
    %266 = vmatprep.mubr.f32.mxu0 0.0
    %267 = vmatmul.mubr.f32.gmra.mxu0 %v146
    %v268 = vpop.f32.mrf.mxu0
    %v269 = vadd.f32 %v73, %v268
    %v270 = vpop.f32.mrf.mxu0
    %271 = vmatprep.mubr.f32.mxu0 0.0
    %272 = vmatmul.mubr.f32.gmra.mxu0 %v149
    %v273 = vpop.f32.mrf.mxu0
    %v274 = vadd.f32 %v78, %v273
    %v275 = vpop.f32.mrf.mxu0
    %276 = vmatprep.mubr.f32.mxu0 0.0
    %277 = vmatmul.mubr.f32.gmra.mxu0 %v152
    %v278 = vpop.f32.mrf.mxu0
    %v279 = vadd.f32 %v83, %v278
    %v280 = vpop.f32.mrf.mxu0
    %281 = vmatprep.mubr.f32.mxu0 0.0
    %282 = vmatmul.mubr.f32.gmra.mxu0 %v155
    %v283 = vpop.f32.mrf.mxu0
    %v284 = vadd.f32 %v88, %v283
    %v285 = vpop.f32.mrf.mxu0
    %286 = vmatprep.mubr.f32.mxu0 0.0
    %287 = vmatmul.mubr.f32.gmra.mxu0 %v158
    %v288 = vpop.f32.mrf.mxu0
    %v289 = vadd.f32 %v93, %v288
    %v290 = vpop.f32.mrf.mxu0
    %291 = vmatprep.mubr.f32.mxu0 0.0
    %292 = vmatmul.mubr.f32.gmra.mxu0 %v161
    %v293 = vpop.f32.mrf.mxu0
    %v294 = vadd.f32 %v98, %v293
    %v295 = vpop.f32.mrf.mxu0
    %296 = vmatprep.mubr.f32.mxu0 0.0
    %297 = vmatmul.mubr.f32.gmra.mxu0 %v164
    %v298 = vpop.f32.mrf.mxu0
    %v299 = vadd.f32 %v103, %v298
    %v300 = vpop.f32.mrf.mxu0
    %301 = vmatprep.mubr.f32.mxu0 0.0
    %302 = vmatmul.mubr.f32.gmra.mxu0 %v167
    %v303 = vpop.f32.mrf.mxu0
    %v304 = vadd.f32 %v108, %v303
    %v305 = vpop.f32.mrf.mxu0
    %306 = vmatprep.mubr.f32.mxu0 0.0
    %307 = vmatmul.mubr.f32.gmra.mxu0 %v170
    %v308 = vpop.f32.mrf.mxu0
    %v309 = vadd.f32 %v113, %v308
    %v310 = vpop.f32.mrf.mxu0
    %311 = vmatprep.mubr.f32.mxu0 0.0
    %312 = vmatmul.mubr.f32.gmra.mxu0 %v173
    %v313 = vpop.f32.mrf.mxu0
    %v314 = vadd.f32 %v118, %v313
    %v315 = vpop.f32.mrf.mxu0
    %316 = vmatprep.mubr.f32.mxu0 0.0
    %317 = vmatmul.mubr.f32.gmra.mxu0 %v176
    %v318 = vpop.f32.mrf.mxu0
    %v319 = vadd.f32 %v123, %v318
    %v320 = vpop.f32.mrf.mxu0
    %321 = vmatprep.mubr.f32.mxu0 0.0
    %322 = vmatmul.mubr.f32.gmra.mxu0 %v179
    %v323 = vpop.f32.mrf.mxu0
    %v324 = vadd.f32 %v128, %v323
    %v325 = vpop.f32.mrf.mxu0
    %326 = vmatprep.mubr.f32.mxu0 0.0
    %327 = vmatmul.mubr.f32.gmra.mxu0 %v182
    %v328 = vpop.f32.mrf.mxu0
    %v329 = vadd.f32 %v133, %v328
    %v330 = vpop.f32.mrf.mxu0
    %331 = vdwg.mxu0
    %v332 = vmax.f32 %v254, 0.0
    %v333 = vmax.f32 %v259, 0.0
    %v334 = vmax.f32 %v264, 0.0
    %v335 = vmax.f32 %v269, 0.0
    %v336 = vmax.f32 %v274, 0.0
    %v337 = vmax.f32 %v279, 0.0
    %v338 = vmax.f32 %v284, 0.0
    %v339 = vmax.f32 %v289, 0.0
    %v340 = vmax.f32 %v294, 0.0
    %v341 = vmax.f32 %v299, 0.0
    %v342 = vmax.f32 %v304, 0.0
    %v343 = vmax.f32 %v309, 0.0
    %v344 = vmax.f32 %v314, 0.0
    %v345 = vmax.f32 %v319, 0.0
    %v346 = vmax.f32 %v324, 0.0
    %v347 = vmax.f32 %v329, 0.0
    %v348 = vld [vmem:[%s3] sm:$0xff]
    %v349 = vld [vmem:[%s3 + $0x8] sm:$0xff]
    %v350 = vld [vmem:[%s3 + $0x10] sm:$0xff]
    %v351 = vld [vmem:[%s3 + $0x18] sm:$0xff]
    %v352 = vld [vmem:[%s3 + $0x20] sm:$0xff]
    %v353 = vld [vmem:[%s3 + $0x28] sm:$0xff]
    %v354 = vld [vmem:[%s3 + $0x30] sm:$0xff]
    %v355 = vld [vmem:[%s3 + $0x38] sm:$0xff]
    %v356 = vld [vmem:[%s3 + $0x40] sm:$0xff]
    %v357 = vld [vmem:[%s3 + $0x48] sm:$0xff]
    %v358 = vld [vmem:[%s3 + $0x50] sm:$0xff]
    %v359 = vld [vmem:[%s3 + $0x58] sm:$0xff]
    %v360 = vld [vmem:[%s3 + $0x60] sm:$0xff]
    %v361 = vld [vmem:[%s3 + $0x68] sm:$0xff]
    %v362 = vld [vmem:[%s3 + $0x70] sm:$0xff]
    %v363 = vld [vmem:[%s3 + $0x78] sm:$0xff]
    %365 = vset.pattern.permute.xlu0 0
    %366 = vperm.xlu0 %365, %v348
    %v367 = vpop.permute.xlu0 %366
    %370 = vset.pattern.permute.xlu0 0
    %371 = vperm.xlu0 %370, %v349
    %v372 = vpop.permute.xlu0 %371
    %375 = vset.pattern.permute.xlu0 0
    %376 = vperm.xlu0 %375, %v350
    %v377 = vpop.permute.xlu0 %376
    %380 = vset.pattern.permute.xlu0 0
    %381 = vperm.xlu0 %380, %v351
    %v382 = vpop.permute.xlu0 %381
    %385 = vset.pattern.permute.xlu0 0
    %386 = vperm.xlu0 %385, %v352
    %v387 = vpop.permute.xlu0 %386
    %390 = vset.pattern.permute.xlu0 0
    %391 = vperm.xlu0 %390, %v353
    %v392 = vpop.permute.xlu0 %391
    %395 = vset.pattern.permute.xlu0 0
    %396 = vperm.xlu0 %395, %v354
    %v397 = vpop.permute.xlu0 %396
    %400 = vset.pattern.permute.xlu0 0
    %401 = vperm.xlu0 %400, %v355
    %v402 = vpop.permute.xlu0 %401
    %405 = vset.pattern.permute.xlu0 0
    %406 = vperm.xlu0 %405, %v356
    %v407 = vpop.permute.xlu0 %406
    %410 = vset.pattern.permute.xlu0 0
    %411 = vperm.xlu0 %410, %v357
    %v412 = vpop.permute.xlu0 %411
    %415 = vset.pattern.permute.xlu0 0
    %416 = vperm.xlu0 %415, %v358
    %v417 = vpop.permute.xlu0 %416
    %420 = vset.pattern.permute.xlu0 0
    %421 = vperm.xlu0 %420, %v359
    %v422 = vpop.permute.xlu0 %421
    %425 = vset.pattern.permute.xlu0 0
    %426 = vperm.xlu0 %425, %v360
    %v427 = vpop.permute.xlu0 %426
    %430 = vset.pattern.permute.xlu0 0
    %431 = vperm.xlu0 %430, %v361
    %v432 = vpop.permute.xlu0 %431
    %435 = vset.pattern.permute.xlu0 0
    %436 = vperm.xlu0 %435, %v362
    %v437 = vpop.permute.xlu0 %436
    %440 = vset.pattern.permute.xlu0 0
    %441 = vperm.xlu0 %440, %v363
    %v442 = vpop.permute.xlu0 %441
    %v444 = vmul.f32 %v332, %v367
    %v445 = vmul.f32 %v333, %v372
    %v446 = vmul.f32 %v334, %v377
    %v447 = vmul.f32 %v335, %v382
    %v448 = vmul.f32 %v336, %v387
    %v449 = vmul.f32 %v337, %v392
    %v450 = vmul.f32 %v338, %v397
    %v451 = vmul.f32 %v339, %v402
    %v452 = vmul.f32 %v340, %v407
    %v453 = vmul.f32 %v341, %v412
    %v454 = vmul.f32 %v342, %v417
    %v455 = vmul.f32 %v343, %v422
    %v456 = vmul.f32 %v344, %v427
    %v457 = vmul.f32 %v345, %v432
    %v458 = vmul.f32 %v346, %v437
    %v459 = vmul.f32 %v347, %v442
    %vm460 = vcmask 64512
    %v461 = vsel %vm460, %v444, 0.0
    %v462 = vsel %vm460, %v445, 0.0
    %v463 = vadd.f32 %v461, %v462
    %v464 = vsel %vm460, %v446, 0.0
    %v465 = vadd.f32 %v463, %v464
    %v466 = vsel %vm460, %v447, 0.0
    %v467 = vadd.f32 %v465, %v466
    %v468 = vsel %vm460, %v448, 0.0
    %v469 = vadd.f32 %v467, %v468
    %v470 = vsel %vm460, %v449, 0.0
    %v471 = vadd.f32 %v469, %v470
    %v472 = vsel %vm460, %v450, 0.0
    %v473 = vadd.f32 %v471, %v472
    %v474 = vsel %vm460, %v451, 0.0
    %v475 = vadd.f32 %v473, %v474
    %v476 = vsel %vm460, %v452, 0.0
    %v477 = vadd.f32 %v475, %v476
    %v478 = vsel %vm460, %v453, 0.0
    %v479 = vadd.f32 %v477, %v478
    %v480 = vsel %vm460, %v454, 0.0
    %v481 = vadd.f32 %v479, %v480
    %v482 = vsel %vm460, %v455, 0.0
    %v483 = vadd.f32 %v481, %v482
    %v484 = vsel %vm460, %v456, 0.0
    %v485 = vadd.f32 %v483, %v484
    %v486 = vsel %vm460, %v457, 0.0
    %v487 = vadd.f32 %v485, %v486
    %v488 = vsel %vm460, %v458, 0.0
    %v489 = vadd.f32 %v487, %v488
    %v490 = vsel %vm460, %v459, 0.0
    %v491 = vadd.f32 %v489, %v490
    %v492 = vrot.slane %v491, 4
    %v493 = vadd.f32 %v491, %v492
    %v494 = vrot.slane %v493, 2
    %v495 = vadd.f32 %v493, %v494
    %v496 = vrot.slane %v495, 1
    %v497 = vadd.f32 %v495, %v496
    %s498 = sld [smem:[#allocation2]]
    %v499 = vstv %s498
    %v500 = vadd.f32 %v497, %v499
    %v501 = vsub.f32 0.0, %v500
    %v502 = vmul.f32 %v501, 1.442695
    %v503 = vpow.pop %v502
    %v504 = vadd.f32 %v503, 1.0
    %v505 = vrcp.pop %v504
    %vm506 = vcmask 57344
    %507 = vst.msk [vmem:[#allocation3] sm:$0x1] %vm506, %v505
    // Predicated region
    $region22: #{tpu_custom_call.1} parent=1 // pred_check
      _
    $region23: #{tpu_custom_call.1} parent=1 // pred_check_branch
      %509 = sbr.rel (0) target = $region25
    $region24: #{tpu_custom_call.1} parent=1 // pred_region
      %s511 = ssub.s32 16, 16
      %512 = vsyncadd [#allocation4], %s511
      %s514 = sshll.u32 [#allocation3], 4
      %s515 = int_to_ptr.vmem [resolvable:$true] %s514
      %517 = dma.vmem_to_hbm [thread:$0]  %s515, 16, %s5, [#allocation4]
    $region25: #{tpu_custom_call.1} parent=1 // pred_fallthru
      _
    // Predicated region
    $region26: #{tpu_custom_call.1} parent=1 // pred_check
      _
    $region27: #{tpu_custom_call.1} parent=1 // pred_check_branch
      %519 = sbr.rel (0) target = $region29
    $region28: #{tpu_custom_call.1} parent=1 // pred_region
      %520 = dma.done [#allocation4], 16
    $region29: #{tpu_custom_call.1} parent=1 // pred_fallthru
      _
    %521 = vsyncpa [#allocation4], 1

</llo_original>
